<compile_context>
chip_gen: v5e
topology: v5e:2x2
jax: 0.10.0
libtpu: 0.0.40
codegen_flags: <defaults>
</compile_context>

<pallas_src>
import numpy as np
import jax
import jax.numpy as jnp
from jax import lax
from jax.experimental import pallas as pl
from jax.experimental.pallas import tpu as pltpu


def fused_conv_pool_mm_kernel(x_ref, p_ref, o_ref):
    """One batch element per grid step; everything lives in VMEM.

    x_ref : (1, Cin, H, W)     input image block
    p_ref : (10, Cin, 2*Cout)  folded parameter slab:
                                 p[0..8]: effective weights for the 9 boundary
                                          stats (1x1-conv in lanes 0..Cout-1,
                                          3x3-conv in lanes Cout..2Cout-1),
                                          already scaled by 1/(H*W);
                                 p[9]   : biases in sublane 0, zeros elsewhere.
    o_ref : (1, Cout, Cout)    mm(v1, v2) = outer product of the pooled vectors
    """
    x = x_ref[0]                                        # (Cin, H, W)
    p = p_ref[...]                                      # (10, Cin, 2*Cout)
    _, H, W = x.shape
    two_cout = p.shape[-1]
    cout = two_cout // 2

    # --- 9 per-channel boundary statistics (each (Cin, 1)) ------------------
    col_sum = jnp.sum(x, axis=1)                        # (Cin, W)
    total = jnp.sum(col_sum, axis=1, keepdims=True)     # (Cin, 1)
    first_col = col_sum[:, 0:1]                         # sum_i x[c, i, 0]
    last_col = col_sum[:, W - 1:W]                      # sum_i x[c, i, W-1]

    top = x[:, 0:1, :]                                  # (Cin, 1, W)
    bot = x[:, H - 1:H, :]                              # (Cin, 1, W)
    first_row = jnp.sum(top, axis=2)                    # (Cin, 1)
    last_row = jnp.sum(bot, axis=2)                     # (Cin, 1)
    c_tl = jnp.sum(top[:, :, 0:1], axis=2)              # x[c, 0, 0]
    c_tr = jnp.sum(top[:, :, W - 1:W], axis=2)          # x[c, 0, W-1]
    c_bl = jnp.sum(bot[:, :, 0:1], axis=2)              # x[c, H-1, 0]
    c_br = jnp.sum(bot[:, :, W - 1:W], axis=2)          # x[c, H-1, W-1]

    stats = (total, first_row, last_row, first_col, last_col,
             c_tl, c_tr, c_bl, c_br)

    # --- contract stats with the folded weights (pure VPU, no MXU) ----------
    acc = p[9]                                          # bias block (Cin, 2*Cout)
    for j, s in enumerate(stats):                       # 9 broadcast mul-adds
        acc = acc + s * p[j]
    row = jnp.sum(acc, axis=0, keepdims=True)           # (1, 2*Cout)

    v1 = row[:, 0:cout]                                 # pooled 1x1 conv  (1, Cout)
    v2 = row[:, cout:two_cout]                          # pooled 3x3 conv  (1, Cout)
    o_ref[...] = (jnp.transpose(v1) * v2)[None]         # (1, Cout, Cout)


# Coefficients expressing each 3x3 / pad=1 tap-window sum as a +/-1 combination
# of the 9 boundary stats.  Stat index:
#   0 total, 1 first_row, 2 last_row, 3 first_col, 4 last_col,
#   5 corner(0,0), 6 corner(0,W-1), 7 corner(H-1,0), 8 corner(H-1,W-1)
_TAP_COEFFS = np.zeros((3, 3, 9), np.float32)
_TAP_COEFFS[:, :, 0] = 1.0        # every tap window starts from the full sum
_TAP_COEFFS[0, :, 2] -= 1.0       # kh=0 window excludes the last row
_TAP_COEFFS[2, :, 1] -= 1.0       # kh=2 window excludes the first row
_TAP_COEFFS[:, 0, 4] -= 1.0       # kw=0 window excludes the last column
_TAP_COEFFS[:, 2, 3] -= 1.0       # kw=2 window excludes the first column
_TAP_COEFFS[0, 0, 8] += 1.0       # add back doubly-removed corner (H-1, W-1)
_TAP_COEFFS[0, 2, 7] += 1.0       # corner (H-1, 0)
_TAP_COEFFS[2, 0, 6] += 1.0       # corner (0, W-1)
_TAP_COEFFS[2, 2, 5] += 1.0       # corner (0, 0)


@jax.jit
def model_forward(x, w3x3, b3x3, w1x1, b1x1):
    """x: (N, Cin, H, W) f32; w3x3/b3x3: module conv1 (3x3, pad=1) params;
    w1x1/b1x1: module conv2 (1x1) params.  Returns (N, Cout, Cout)."""
    n, cin, h, w = x.shape
    cout = w3x3.shape[0]
    inv_hw = 1.0 / float(h * w)

    # Fold tap inclusion/exclusion + 1/(H*W) into the 3x3 conv weights (tiny
    # constant-size XLA ops in the wrapper, not in the kernel).
    m = jnp.asarray(_TAP_COEFFS)
    w3eff = jnp.einsum("ocuv,uvj->jco", w3x3, m) * inv_hw        # (9, Cin, Cout)
    # 1x1 conv only needs the 'total' stat (index 0).
    w1eff = jnp.zeros((9, cin, cout), jnp.float32).at[0].set(
        jnp.transpose(w1x1.reshape(cout, cin)) * inv_hw)          # (9, Cin, Cout)

    wc = jnp.concatenate([w1eff, w3eff], axis=-1)                 # (9, Cin, 2*Cout)
    bias = jnp.concatenate([b1x1, b3x3])                          # (2*Cout,)
    bias_blk = jnp.zeros((1, cin, 2 * cout), jnp.float32).at[0, 0, :].set(bias)
    slab = jnp.concatenate([wc, bias_blk], axis=0)                # (10, Cin, 2*Cout)

    return pl.pallas_call(
        fused_conv_pool_mm_kernel,
        out_shape=jax.ShapeDtypeStruct((n, cout, cout), jnp.float32),
        grid=(n,),
        in_specs=[
            pl.BlockSpec((1, cin, h, w), lambda b: (b, 0, 0, 0)),
            pl.BlockSpec((10, cin, 2 * cout), lambda b: (0, 0, 0)),
        ],
        out_specs=pl.BlockSpec((1, cout, cout), lambda b: (b, 0, 0)),
        compiler_params=pltpu.CompilerParams(dimension_semantics=("parallel",)),
    )(x, slab)


def reference_forward(x, w3x3, b3x3, w1x1, b1x1):
    """Pure-JAX reference of the (repaired) forward pass."""
    dn = ("NCHW", "OIHW", "NCHW")
    y3 = lax.conv_general_dilated(x, w3x3, (1, 1), ((1, 1), (1, 1)),
                                  dimension_numbers=dn) + b3x3[None, :, None, None]
    y1 = lax.conv_general_dilated(x, w1x1, (1, 1), "VALID",
                                  dimension_numbers=dn) + b1x1[None, :, None, None]
    v1 = jnp.mean(y1, axis=(2, 3))            # pooled 1x1 conv, (N, Cout)
    v2 = jnp.mean(y3, axis=(2, 3))            # pooled 3x3 conv, (N, Cout)
    return jnp.einsum("ni,nj->nij", v1, v2)   # mm(v1, v2) per batch element


if __name__ == "__main__":
    key = jax.random.PRNGKey(0)
    k_x, k_w3, k_b3, k_w1, k_b1 = jax.random.split(key, 5)

    # Shapes of the original module: x = torch.randn(1, 3, 64, 64)
    N, CIN, H, W = 1, 3, 64, 64
    COUT = 8

    x = jax.random.normal(k_x, (N, CIN, H, W), dtype=jnp.float32)

    # Deterministic init mimicking PyTorch Conv2d defaults (uniform +-1/sqrt(fan_in)).
    bnd3 = float(1.0 / np.sqrt(CIN * 3 * 3))
    bnd1 = float(1.0 / np.sqrt(CIN * 1 * 1))
    w3x3 = jax.random.uniform(k_w3, (COUT, CIN, 3, 3), jnp.float32, -bnd3, bnd3)
    b3x3 = jax.random.uniform(k_b3, (COUT,), jnp.float32, -bnd3, bnd3)
    w1x1 = jax.random.uniform(k_w1, (COUT, CIN, 1, 1), jnp.float32, -bnd1, bnd1)
    b1x1 = jax.random.uniform(k_b1, (COUT,), jnp.float32, -bnd1, bnd1)

    out = jax.block_until_ready(model_forward(x, w3x3, b3x3, w1x1, b1x1))
    ref = jax.block_until_ready(reference_forward(x, w3x3, b3x3, w1x1, b1x1))

    assert out.shape == (N, COUT, COUT), out.shape
    assert jnp.allclose(out, ref, rtol=1e-3, atol=1e-3), (out, ref)

    print("KERNEL_OK")
</pallas_src>

<mosaic_0001>
module attributes {stable_mosaic.version = 11 : i64} {
  func.func @fused_conv_pool_mm_kernel(%arg0: i32, %arg1: memref<1x3x64x64xf32, #tpu.memory_space<vmem>>, %arg2: memref<10x3x16xf32, #tpu.memory_space<vmem>>, %arg3: memref<1x8x8xf32, #tpu.memory_space<vmem>>) attributes {dimension_semantics = [#tpu.dimension_semantics<parallel>], iteration_bounds = array<i64: 1>, scalar_prefetch = 0 : i64, scratch_operands = 0 : i64, tpu.core_type = #tpu.core_type<tc>, window_params = [{transform_indices = @transform_0, window_bounds = array<i64: 1, 3, 64, 64>}, {pipeline_mode = #tpu.pipeline_mode<synchronous>, transform_indices = @transform_1, window_bounds = array<i64: 10, 3, 16>}, {transform_indices = @transform_2, window_bounds = array<i64: 1, 8, 8>}]} {
    %c0 = arith.constant 0 : index
    %c0_0 = arith.constant 0 : index
    %c0_1 = arith.constant 0 : index
    %c0_2 = arith.constant 0 : index
    %0 = vector.load %arg1[%c0, %c0_0, %c0_1, %c0_2] : memref<1x3x64x64xf32, #tpu.memory_space<vmem>>, vector<1x3x64x64xf32>
    %1 = vector.shape_cast %0 : vector<1x3x64x64xf32> to vector<3x64x64xf32>
    %c0_3 = arith.constant 0 : index
    %c0_4 = arith.constant 0 : index
    %c0_5 = arith.constant 0 : index
    %2 = vector.load %arg2[%c0_3, %c0_4, %c0_5] : memref<10x3x16xf32, #tpu.memory_space<vmem>>, vector<10x3x16xf32>
    %cst = arith.constant dense<0.000000e+00> : vector<3x64xf32>
    %3 = vector.multi_reduction <add>, %1, %cst [1] : vector<3x64x64xf32> to vector<3x64xf32>
    %cst_6 = arith.constant dense<0.000000e+00> : vector<3xf32>
    %4 = vector.multi_reduction <add>, %3, %cst_6 [1] : vector<3x64xf32> to vector<3xf32>
    %5 = vector.shape_cast %4 : vector<3xf32> to vector<3x1xf32>
    %6 = vector.extract_strided_slice %3 {offsets = [0, 0], sizes = [3, 1], strides = [1, 1]} : vector<3x64xf32> to vector<3x1xf32>
    %7 = vector.extract_strided_slice %3 {offsets = [0, 63], sizes = [3, 1], strides = [1, 1]} : vector<3x64xf32> to vector<3x1xf32>
    %8 = vector.extract_strided_slice %1 {offsets = [0, 0, 0], sizes = [3, 1, 64], strides = [1, 1, 1]} : vector<3x64x64xf32> to vector<3x1x64xf32>
    %9 = vector.extract_strided_slice %1 {offsets = [0, 63, 0], sizes = [3, 1, 64], strides = [1, 1, 1]} : vector<3x64x64xf32> to vector<3x1x64xf32>
    %cst_7 = arith.constant dense<0.000000e+00> : vector<3x1xf32>
    %10 = vector.multi_reduction <add>, %8, %cst_7 [2] : vector<3x1x64xf32> to vector<3x1xf32>
    %cst_8 = arith.constant dense<0.000000e+00> : vector<3x1xf32>
    %11 = vector.multi_reduction <add>, %9, %cst_8 [2] : vector<3x1x64xf32> to vector<3x1xf32>
    %12 = vector.extract_strided_slice %8 {offsets = [0, 0, 0], sizes = [3, 1, 1], strides = [1, 1, 1]} : vector<3x1x64xf32> to vector<3x1x1xf32>
    %cst_9 = arith.constant dense<0.000000e+00> : vector<3x1xf32>
    %13 = vector.multi_reduction <add>, %12, %cst_9 [2] : vector<3x1x1xf32> to vector<3x1xf32>
    %14 = vector.extract_strided_slice %8 {offsets = [0, 0, 63], sizes = [3, 1, 1], strides = [1, 1, 1]} : vector<3x1x64xf32> to vector<3x1x1xf32>
    %cst_10 = arith.constant dense<0.000000e+00> : vector<3x1xf32>
    %15 = vector.multi_reduction <add>, %14, %cst_10 [2] : vector<3x1x1xf32> to vector<3x1xf32>
    %16 = vector.extract_strided_slice %9 {offsets = [0, 0, 0], sizes = [3, 1, 1], strides = [1, 1, 1]} : vector<3x1x64xf32> to vector<3x1x1xf32>
    %cst_11 = arith.constant dense<0.000000e+00> : vector<3x1xf32>
    %17 = vector.multi_reduction <add>, %16, %cst_11 [2] : vector<3x1x1xf32> to vector<3x1xf32>
    %18 = vector.extract_strided_slice %9 {offsets = [0, 0, 63], sizes = [3, 1, 1], strides = [1, 1, 1]} : vector<3x1x64xf32> to vector<3x1x1xf32>
    %cst_12 = arith.constant dense<0.000000e+00> : vector<3x1xf32>
    %19 = vector.multi_reduction <add>, %18, %cst_12 [2] : vector<3x1x1xf32> to vector<3x1xf32>
    %20 = vector.extract_strided_slice %2 {offsets = [9, 0, 0], sizes = [1, 3, 16], strides = [1, 1, 1]} : vector<10x3x16xf32> to vector<1x3x16xf32>
    %21 = vector.shape_cast %20 : vector<1x3x16xf32> to vector<3x16xf32>
    %22 = vector.extract_strided_slice %2 {offsets = [0, 0, 0], sizes = [1, 3, 16], strides = [1, 1, 1]} : vector<10x3x16xf32> to vector<1x3x16xf32>
    %23 = vector.shape_cast %22 : vector<1x3x16xf32> to vector<3x16xf32>
    %24 = vector.broadcast %5 : vector<3x1xf32> to vector<3x16xf32>
    %25 = arith.mulf %24, %23 : vector<3x16xf32>
    %26 = arith.addf %21, %25 : vector<3x16xf32>
    %27 = vector.extract_strided_slice %2 {offsets = [1, 0, 0], sizes = [1, 3, 16], strides = [1, 1, 1]} : vector<10x3x16xf32> to vector<1x3x16xf32>
    %28 = vector.shape_cast %27 : vector<1x3x16xf32> to vector<3x16xf32>
    %29 = vector.broadcast %10 : vector<3x1xf32> to vector<3x16xf32>
    %30 = arith.mulf %29, %28 : vector<3x16xf32>
    %31 = arith.addf %26, %30 : vector<3x16xf32>
    %32 = vector.extract_strided_slice %2 {offsets = [2, 0, 0], sizes = [1, 3, 16], strides = [1, 1, 1]} : vector<10x3x16xf32> to vector<1x3x16xf32>
    %33 = vector.shape_cast %32 : vector<1x3x16xf32> to vector<3x16xf32>
    %34 = vector.broadcast %11 : vector<3x1xf32> to vector<3x16xf32>
    %35 = arith.mulf %34, %33 : vector<3x16xf32>
    %36 = arith.addf %31, %35 : vector<3x16xf32>
    %37 = vector.extract_strided_slice %2 {offsets = [3, 0, 0], sizes = [1, 3, 16], strides = [1, 1, 1]} : vector<10x3x16xf32> to vector<1x3x16xf32>
    %38 = vector.shape_cast %37 : vector<1x3x16xf32> to vector<3x16xf32>
    %39 = vector.broadcast %6 : vector<3x1xf32> to vector<3x16xf32>
    %40 = arith.mulf %39, %38 : vector<3x16xf32>
    %41 = arith.addf %36, %40 : vector<3x16xf32>
    %42 = vector.extract_strided_slice %2 {offsets = [4, 0, 0], sizes = [1, 3, 16], strides = [1, 1, 1]} : vector<10x3x16xf32> to vector<1x3x16xf32>
    %43 = vector.shape_cast %42 : vector<1x3x16xf32> to vector<3x16xf32>
    %44 = vector.broadcast %7 : vector<3x1xf32> to vector<3x16xf32>
    %45 = arith.mulf %44, %43 : vector<3x16xf32>
    %46 = arith.addf %41, %45 : vector<3x16xf32>
    %47 = vector.extract_strided_slice %2 {offsets = [5, 0, 0], sizes = [1, 3, 16], strides = [1, 1, 1]} : vector<10x3x16xf32> to vector<1x3x16xf32>
    %48 = vector.shape_cast %47 : vector<1x3x16xf32> to vector<3x16xf32>
    %49 = vector.broadcast %13 : vector<3x1xf32> to vector<3x16xf32>
    %50 = arith.mulf %49, %48 : vector<3x16xf32>
    %51 = arith.addf %46, %50 : vector<3x16xf32>
    %52 = vector.extract_strided_slice %2 {offsets = [6, 0, 0], sizes = [1, 3, 16], strides = [1, 1, 1]} : vector<10x3x16xf32> to vector<1x3x16xf32>
    %53 = vector.shape_cast %52 : vector<1x3x16xf32> to vector<3x16xf32>
    %54 = vector.broadcast %15 : vector<3x1xf32> to vector<3x16xf32>
    %55 = arith.mulf %54, %53 : vector<3x16xf32>
    %56 = arith.addf %51, %55 : vector<3x16xf32>
    %57 = vector.extract_strided_slice %2 {offsets = [7, 0, 0], sizes = [1, 3, 16], strides = [1, 1, 1]} : vector<10x3x16xf32> to vector<1x3x16xf32>
    %58 = vector.shape_cast %57 : vector<1x3x16xf32> to vector<3x16xf32>
    %59 = vector.broadcast %17 : vector<3x1xf32> to vector<3x16xf32>
    %60 = arith.mulf %59, %58 : vector<3x16xf32>
    %61 = arith.addf %56, %60 : vector<3x16xf32>
    %62 = vector.extract_strided_slice %2 {offsets = [8, 0, 0], sizes = [1, 3, 16], strides = [1, 1, 1]} : vector<10x3x16xf32> to vector<1x3x16xf32>
    %63 = vector.shape_cast %62 : vector<1x3x16xf32> to vector<3x16xf32>
    %64 = vector.broadcast %19 : vector<3x1xf32> to vector<3x16xf32>
    %65 = arith.mulf %64, %63 : vector<3x16xf32>
    %66 = arith.addf %61, %65 : vector<3x16xf32>
    %cst_13 = arith.constant dense<0.000000e+00> : vector<16xf32>
    %67 = vector.multi_reduction <add>, %66, %cst_13 [0] : vector<3x16xf32> to vector<16xf32>
    %68 = vector.shape_cast %67 : vector<16xf32> to vector<1x16xf32>
    %69 = vector.extract_strided_slice %68 {offsets = [0, 0], sizes = [1, 8], strides = [1, 1]} : vector<1x16xf32> to vector<1x8xf32>
    %70 = vector.extract_strided_slice %68 {offsets = [0, 8], sizes = [1, 8], strides = [1, 1]} : vector<1x16xf32> to vector<1x8xf32>
    %71 = tpu.transpose %69, [1, 0] : vector<1x8xf32> -> vector<8x1xf32>
    %72 = vector.broadcast %71 : vector<8x1xf32> to vector<8x8xf32>
    %73 = vector.broadcast %70 : vector<1x8xf32> to vector<8x8xf32>
    %74 = arith.mulf %72, %73 : vector<8x8xf32>
    %75 = vector.shape_cast %74 : vector<8x8xf32> to vector<1x8x8xf32>
    %c0_14 = arith.constant 0 : index
    %c0_15 = arith.constant 0 : index
    %c0_16 = arith.constant 0 : index
    %76 = vector.load %arg3[%c0_14, %c0_15, %c0_16] : memref<1x8x8xf32, #tpu.memory_space<vmem>>, vector<1x8x8xf32>
    tpu.vector_store %arg3[%c0_14, %c0_15, %c0_16], %75 {strides = array<i32>} : memref<1x8x8xf32, #tpu.memory_space<vmem>>, vector<1x8x8xf32>,
    return
  }
  func.func @transform_0(%arg0: i32) -> (i32, i32, i32, i32) {
    %c0_i32 = arith.constant 0 : i32
    %c0_i32_0 = arith.constant 0 : i32
    %c0_i32_1 = arith.constant 0 : i32
    %c0_i32_2 = arith.constant 0 : i32
    return %arg0, %c0_i32, %c0_i32_0, %c0_i32_1 : i32, i32, i32, i32
  }
  func.func @transform_1(%arg0: i32) -> (i32, i32, i32) {
    %c0_i32 = arith.constant 0 : i32
    %c0_i32_0 = arith.constant 0 : i32
    %c0_i32_1 = arith.constant 0 : i32
    %c0_i32_2 = arith.constant 0 : i32
    return %c0_i32, %c0_i32_0, %c0_i32_1 : i32, i32, i32
  }
  func.func @transform_2(%arg0: i32) -> (i32, i32, i32) {
    %c0_i32 = arith.constant 0 : i32
    %c0_i32_0 = arith.constant 0 : i32
    %c0_i32_1 = arith.constant 0 : i32
    return %arg0, %c0_i32, %c0_i32_0 : i32, i32, i32
  }
}

</mosaic_0001>

<llo_original>
// kernel: model_forward.1
$region0: #{model_forward.1}
  #allocation0 [shape = 'u32[]', space=smem, size = 0x4, offset = 0x4, fixed_abs, tag = 'smem constant byte address 0x4 - core index']
  #allocation1 [shape = 'u32[72,128]{1,0:T(1,128)}', space=vmem, size = 0x9000, scoped, tag = 'internal scratch']
  %s0 = inlined_call_operand.vmem [shape: f32[1,3,64,64], index: 0, kind: input, shape index: {}]
  %s1 = inlined_call_operand.vmem [shape: f32[10,3,16], index: 1, kind: input, shape index: {}]
  %s2 = inlined_call_operand.hbm [shape: f32[1,8,8], index: 2, kind: output, shape index: {}]
  %s3 = sld [smem:[#allocation0]]
  $region18: #{model_forward.1} parent=0
    _
  %s5 = ssub.s32 1, %s3
  %s6 = scalar_select 0, %s5, %s3
  $region1: #{model_forward.1} parent=0
    #allocation2 [shape = 'u8[4096]{0}', space=vmem, size = 0x1000, scoped, tag = 'output window, operand 0, single buffered']
    #allocation3 [shape = 's32[1]{0}', space=sflag, size = 0x4, scoped, tag = 'scoped memory for model_forward.1']
    %7 = vsyncpa [#allocation3], 0
    // Predicated region
    $region2: #{model_forward.1} parent=1 // pred_check
      _
    $region3: #{model_forward.1} parent=1 // pred_check_branch
      %9 = sbr.rel (0) target = $region5
    $region4: #{model_forward.1} parent=1 // pred_region
      _
    $region5: #{model_forward.1} parent=1 // pred_fallthru
      _
    // Predicated region
    $region6: #{model_forward.1} parent=1 // pred_check
      _
    $region7: #{model_forward.1} parent=1 // pred_check_branch
      %11 = sbr.rel (0) target = $region9
    $region8: #{model_forward.1} parent=1 // pred_region
      _
    $region9: #{model_forward.1} parent=1 // pred_fallthru
      _
    %v12 = vld [vmem:[%s0] sm:$0xff]
    %v13 = vld [vmem:[%s0 + $0x8] sm:$0xff]
    %v14 = vld [vmem:[%s0 + $0x10] sm:$0xff]
    %v15 = vld [vmem:[%s0 + $0x18] sm:$0xff]
    %v16 = vld [vmem:[%s0 + $0x20] sm:$0xff]
    %v17 = vld [vmem:[%s0 + $0x28] sm:$0xff]
    %v18 = vld [vmem:[%s0 + $0x30] sm:$0xff]
    %v19 = vld [vmem:[%s0 + $0x38] sm:$0xff]
    %v20 = vld [vmem:[%s0 + $0x40] sm:$0xff]
    %v21 = vld [vmem:[%s0 + $0x48] sm:$0xff]
    %v22 = vld [vmem:[%s0 + $0x50] sm:$0xff]
    %v23 = vld [vmem:[%s0 + $0x58] sm:$0xff]
    %v24 = vld [vmem:[%s0 + $0x60] sm:$0xff]
    %v25 = vld [vmem:[%s0 + $0x68] sm:$0xff]
    %v26 = vld [vmem:[%s0 + $0x70] sm:$0xff]
    %v27 = vld [vmem:[%s0 + $0x78] sm:$0xff]
    %v28 = vld [vmem:[%s0 + $0x80] sm:$0xff]
    %v29 = vld [vmem:[%s0 + $0x88] sm:$0xff]
    %v30 = vld [vmem:[%s0 + $0x90] sm:$0xff]
    %v31 = vld [vmem:[%s0 + $0x98] sm:$0xff]
    %v32 = vld [vmem:[%s0 + $0xa0] sm:$0xff]
    %v33 = vld [vmem:[%s0 + $0xa8] sm:$0xff]
    %v34 = vld [vmem:[%s0 + $0xb0] sm:$0xff]
    %v35 = vld [vmem:[%s0 + $0xb8] sm:$0xff]
    %v36 = vld [vmem:[%s1] sm:$0x7]
    %v37 = vld [vmem:[%s1 + $0x4] sm:$0x7]
    %v38 = vld [vmem:[%s1 + $0x8] sm:$0x7]
    %v39 = vld [vmem:[%s1 + $0xc] sm:$0x7]
    %v40 = vld [vmem:[%s1 + $0x10] sm:$0x7]
    %v41 = vld [vmem:[%s1 + $0x14] sm:$0x7]
    %v42 = vld [vmem:[%s1 + $0x18] sm:$0x7]
    %v43 = vld [vmem:[%s1 + $0x1c] sm:$0x7]
    %v44 = vld [vmem:[%s1 + $0x20] sm:$0x7]
    %v45 = vld [vmem:[%s1 + $0x24] sm:$0x7]
    %vm46 = vcmask 523264
    %v47 = vsel %vm46, %v12, 0.0
    %v48 = vsel %vm46, %v13, 0.0
    %v49 = vadd.f32 %v47, %v48
    %v50 = vsel %vm46, %v14, 0.0
    %v51 = vadd.f32 %v49, %v50
    %v52 = vsel %vm46, %v15, 0.0
    %v53 = vadd.f32 %v51, %v52
    %v54 = vsel %vm46, %v16, 0.0
    %v55 = vadd.f32 %v53, %v54
    %v56 = vsel %vm46, %v17, 0.0
    %v57 = vadd.f32 %v55, %v56
    %v58 = vsel %vm46, %v18, 0.0
    %v59 = vadd.f32 %v57, %v58
    %v60 = vsel %vm46, %v19, 0.0
    %v61 = vadd.f32 %v59, %v60
    %v62 = vrot.slane %v61, 4
    %v63 = vadd.f32 %v61, %v62
    %v64 = vrot.slane %v63, 2
    %v65 = vadd.f32 %v63, %v64
    %v66 = vrot.slane %v65, 1
    %v67 = vadd.f32 %v65, %v66
    %v68 = vsel %vm46, %v20, 0.0
    %v69 = vsel %vm46, %v21, 0.0
    %v70 = vadd.f32 %v68, %v69
    %v71 = vsel %vm46, %v22, 0.0
    %v72 = vadd.f32 %v70, %v71
    %v73 = vsel %vm46, %v23, 0.0
    %v74 = vadd.f32 %v72, %v73
    %v75 = vsel %vm46, %v24, 0.0
    %v76 = vadd.f32 %v74, %v75
    %v77 = vsel %vm46, %v25, 0.0
    %v78 = vadd.f32 %v76, %v77
    %v79 = vsel %vm46, %v26, 0.0
    %v80 = vadd.f32 %v78, %v79
    %v81 = vsel %vm46, %v27, 0.0
    %v82 = vadd.f32 %v80, %v81
    %v83 = vrot.slane %v82, 4
    %v84 = vadd.f32 %v82, %v83
    %v85 = vrot.slane %v84, 2
    %v86 = vadd.f32 %v84, %v85
    %v87 = vrot.slane %v86, 1
    %v88 = vadd.f32 %v86, %v87
    %v89 = vsel %vm46, %v28, 0.0
    %v90 = vsel %vm46, %v29, 0.0
    %v91 = vadd.f32 %v89, %v90
    %v92 = vsel %vm46, %v30, 0.0
    %v93 = vadd.f32 %v91, %v92
    %v94 = vsel %vm46, %v31, 0.0
    %v95 = vadd.f32 %v93, %v94
    %v96 = vsel %vm46, %v32, 0.0
    %v97 = vadd.f32 %v95, %v96
    %v98 = vsel %vm46, %v33, 0.0
    %v99 = vadd.f32 %v97, %v98
    %v100 = vsel %vm46, %v34, 0.0
    %v101 = vadd.f32 %v99, %v100
    %v102 = vsel %vm46, %v35, 0.0
    %v103 = vadd.f32 %v101, %v102
    %v104 = vrot.slane %v103, 4
    %v105 = vadd.f32 %v103, %v104
    %v106 = vrot.slane %v105, 2
    %v107 = vadd.f32 %v105, %v106
    %v108 = vrot.slane %v107, 1
    %v109 = vadd.f32 %v107, %v108
    %vm113 = vcmask 1041409
    %v114 = vsel %vm113, %v88, %v67
    %vm115 = vcmask 1042434
    %v116 = vsel %vm115, %v109, %v114
    %vm118 = vcmask 518144
    %v119 = vsel %vm118, %v116, 0.0
    %120 = vadd.xlane.f32.xlu0 %v119
    %v121 = vpop.xlane.xlu0 %120
    %vm122 = vcmask 516096
    %v123 = vsel %vm122, %v12, 0.0
    %124 = vadd.xlane.f32.xlu0 %v123
    %v125 = vpop.xlane.xlu0 %124
    %v126 = vsel %vm122, %v20, 0.0
    %127 = vadd.xlane.f32.xlu0 %v126
    %v128 = vpop.xlane.xlu0 %127
    %v129 = vsel %vm122, %v28, 0.0
    %130 = vadd.xlane.f32.xlu0 %v129
    %v131 = vpop.xlane.xlu0 %130
    %vm132 = vcmask 523271
    %v133 = vsel %vm132, %v19, 0.0
    %134 = vadd.xlane.f32.xlu0 %v133
    %v135 = vpop.xlane.xlu0 %134
    %v136 = vsel %vm132, %v27, 0.0
    %137 = vadd.xlane.f32.xlu0 %v136
    %v138 = vpop.xlane.xlu0 %137
    %v139 = vsel %vm132, %v35, 0.0
    %140 = vadd.xlane.f32.xlu0 %v139
    %v141 = vpop.xlane.xlu0 %140
    %v142 = vadd.f32 %v12, 0.0
    %v143 = vadd.f32 %v20, 0.0
    %v144 = vadd.f32 %v28, 0.0
    %v145 = vadd.f32 %v19, 0.0
    %v146 = vadd.f32 %v27, 0.0
    %v147 = vadd.f32 %v35, 0.0
    %v148 = vmul.f32 %v121, %v36
    %v149 = vadd.f32 %v45, %v148
    %v150 = vperm.slane %v125, 0
    %v151 = vperm.slane %v128, 0
    %v152 = vperm.slane %v131, 0
    %v154 = vperm.slane %v37, 0
    %v155 = vlaneseq
    %v156 = vshrl.u32 %v155, 7
    %158 = vset.pattern.permute.xlu0 %v156
    %159 = vperm.xlu0 %158, %v154
    %v160 = vpop.permute.xlu0 %159
    %v161 = vlaneseq
    %v162 = vshrl.u32 %v161, 7
    %v163 = vadd.s32 %v162, 8
    %164 = vset.pattern.permute.xlu0 %v163
    %165 = vperm.xlu0 %164, %v154
    %v166 = vpop.permute.xlu0 %165
    %v167 = vperm.slane %v37, 1
    %v168 = vlaneseq
    %v169 = vshrl.u32 %v168, 7
    %171 = vset.pattern.permute.xlu0 %v169
    %172 = vperm.xlu0 %171, %v167
    %v173 = vpop.permute.xlu0 %172
    %v174 = vlaneseq
    %v175 = vshrl.u32 %v174, 7
    %v176 = vadd.s32 %v175, 8
    %177 = vset.pattern.permute.xlu0 %v176
    %178 = vperm.xlu0 %177, %v167
    %v179 = vpop.permute.xlu0 %178
    %v180 = vperm.slane %v37, 2
    %v181 = vlaneseq
    %v182 = vshrl.u32 %v181, 7
    %184 = vset.pattern.permute.xlu0 %v182
    %185 = vperm.xlu0 %184, %v180
    %v186 = vpop.permute.xlu0 %185
    %v187 = vlaneseq
    %v188 = vshrl.u32 %v187, 7
    %v189 = vadd.s32 %v188, 8
    %190 = vset.pattern.permute.xlu0 %v189
    %191 = vperm.xlu0 %190, %v180
    %v192 = vpop.permute.xlu0 %191
    %v199 = vmul.f32 %v150, %v160
    %v200 = vmul.f32 %v150, %v166
    %v201 = vmul.f32 %v151, %v173
    %v202 = vmul.f32 %v151, %v179
    %v203 = vmul.f32 %v152, %v186
    %v204 = vmul.f32 %v152, %v192
    %211 = vset.pattern.permute.xlu0 0
    %212 = vperm.xlu0 %211, %v199
    %v213 = vpop.permute.xlu0 %212
    %214 = vset.pattern.permute.xlu0 0
    %215 = vperm.xlu0 %214, %v200
    %v216 = vpop.permute.xlu0 %215
    %217 = vset.pattern.permute.xlu0 0
    %218 = vperm.xlu0 %217, %v201
    %v219 = vpop.permute.xlu0 %218
    %220 = vset.pattern.permute.xlu0 0
    %221 = vperm.xlu0 %220, %v202
    %v222 = vpop.permute.xlu0 %221
    %223 = vset.pattern.permute.xlu0 0
    %224 = vperm.xlu0 %223, %v203
    %v225 = vpop.permute.xlu0 %224
    %226 = vset.pattern.permute.xlu0 0
    %227 = vperm.xlu0 %226, %v204
    %v228 = vpop.permute.xlu0 %227
    %v229 = vlaneseq
    %v230 = vand.u32 %v229, 127
    %v231 = vperm.slane %v213, %v230
    %v232 = vadd.s32 %v230, 4294967288
    %v233 = vperm.slane %v216, %v232
    %vm234 = vcmask 130112
    %v235 = vsel %vm234, %v233, %v231
    %v236 = vperm.slane %v219, %v230
    %v237 = vperm.slane %v222, %v232
    %v238 = vsel %vm234, %v237, %v236
    %v239 = vperm.slane %v225, %v230
    %v240 = vperm.slane %v228, %v232
    %v241 = vsel %vm234, %v240, %v239
    %v242 = vsel %vm113, %v238, %v235
    %v243 = vsel %vm115, %v241, %v242
    %v245 = vadd.f32 %v149, %v243
    %v246 = vperm.slane %v135, 7
    %v247 = vperm.slane %v138, 7
    %v248 = vperm.slane %v141, 7
    %v250 = vperm.slane %v38, 0
    %v251 = vlaneseq
    %v252 = vshrl.u32 %v251, 7
    %254 = vset.pattern.permute.xlu0 %v252
    %255 = vperm.xlu0 %254, %v250
    %v256 = vpop.permute.xlu0 %255
    %v257 = vlaneseq
    %v258 = vshrl.u32 %v257, 7
    %v259 = vadd.s32 %v258, 8
    %260 = vset.pattern.permute.xlu0 %v259
    %261 = vperm.xlu0 %260, %v250
    %v262 = vpop.permute.xlu0 %261
    %v263 = vperm.slane %v38, 1
    %v264 = vlaneseq
    %v265 = vshrl.u32 %v264, 7
    %267 = vset.pattern.permute.xlu0 %v265
    %268 = vperm.xlu0 %267, %v263
    %v269 = vpop.permute.xlu0 %268
    %v270 = vlaneseq
    %v271 = vshrl.u32 %v270, 7
    %v272 = vadd.s32 %v271, 8
    %273 = vset.pattern.permute.xlu0 %v272
    %274 = vperm.xlu0 %273, %v263
    %v275 = vpop.permute.xlu0 %274
    %v276 = vperm.slane %v38, 2
    %v277 = vlaneseq
    %v278 = vshrl.u32 %v277, 7
    %280 = vset.pattern.permute.xlu0 %v278
    %281 = vperm.xlu0 %280, %v276
    %v282 = vpop.permute.xlu0 %281
    %v283 = vlaneseq
    %v284 = vshrl.u32 %v283, 7
    %v285 = vadd.s32 %v284, 8
    %286 = vset.pattern.permute.xlu0 %v285
    %287 = vperm.xlu0 %286, %v276
    %v288 = vpop.permute.xlu0 %287
    %v295 = vmul.f32 %v246, %v256
    %v296 = vmul.f32 %v246, %v262
    %v297 = vmul.f32 %v247, %v269
    %v298 = vmul.f32 %v247, %v275
    %v299 = vmul.f32 %v248, %v282
    %v300 = vmul.f32 %v248, %v288
    %307 = vset.pattern.permute.xlu0 0
    %308 = vperm.xlu0 %307, %v295
    %v309 = vpop.permute.xlu0 %308
    %310 = vset.pattern.permute.xlu0 0
    %311 = vperm.xlu0 %310, %v296
    %v312 = vpop.permute.xlu0 %311
    %313 = vset.pattern.permute.xlu0 0
    %314 = vperm.xlu0 %313, %v297
    %v315 = vpop.permute.xlu0 %314
    %316 = vset.pattern.permute.xlu0 0
    %317 = vperm.xlu0 %316, %v298
    %v318 = vpop.permute.xlu0 %317
    %319 = vset.pattern.permute.xlu0 0
    %320 = vperm.xlu0 %319, %v299
    %v321 = vpop.permute.xlu0 %320
    %322 = vset.pattern.permute.xlu0 0
    %323 = vperm.xlu0 %322, %v300
    %v324 = vpop.permute.xlu0 %323
    %v325 = vperm.slane %v309, %v230
    %v326 = vperm.slane %v312, %v232
    %v327 = vsel %vm234, %v326, %v325
    %v328 = vperm.slane %v315, %v230
    %v329 = vperm.slane %v318, %v232
    %v330 = vsel %vm234, %v329, %v328
    %v331 = vperm.slane %v321, %v230
    %v332 = vperm.slane %v324, %v232
    %v333 = vsel %vm234, %v332, %v331
    %v334 = vsel %vm113, %v330, %v327
    %v335 = vsel %vm115, %v333, %v334
    %v337 = vadd.f32 %v245, %v335
    %338 = vset.pattern.permute.xlu0 0
    %339 = vperm.xlu0 %338, %v67
    %v340 = vpop.permute.xlu0 %339
    %342 = vset.pattern.permute.xlu0 0
    %343 = vperm.xlu0 %342, %v88
    %v344 = vpop.permute.xlu0 %343
    %346 = vset.pattern.permute.xlu0 0
    %347 = vperm.xlu0 %346, %v109
    %v348 = vpop.permute.xlu0 %347
    %v351 = vrot.slane %v39, 1
    %v352 = vrot.slane %v39, 2
    %v356 = vmul.f32 %v340, %v39
    %v357 = vmul.f32 %v344, %v351
    %v358 = vmul.f32 %v348, %v352
    %v362 = vrot.slane %v357, 7
    %v363 = vsel %vm113, %v362, %v356
    %v364 = vrot.slane %v358, 6
    %v365 = vsel %vm115, %v364, %v363
    %v367 = vadd.f32 %v337, %v365
    %368 = vset.pattern.permute.xlu0 63
    %369 = vperm.xlu0 %368, %v67
    %v370 = vpop.permute.xlu0 %369
    %372 = vset.pattern.permute.xlu0 63
    %373 = vperm.xlu0 %372, %v88
    %v374 = vpop.permute.xlu0 %373
    %376 = vset.pattern.permute.xlu0 63
    %377 = vperm.xlu0 %376, %v109
    %v378 = vpop.permute.xlu0 %377
    %v381 = vrot.slane %v40, 1
    %v382 = vrot.slane %v40, 2
    %v386 = vmul.f32 %v370, %v40
    %v387 = vmul.f32 %v374, %v381
    %v388 = vmul.f32 %v378, %v382
    %v392 = vrot.slane %v387, 7
    %v393 = vsel %vm113, %v392, %v386
    %v394 = vrot.slane %v388, 6
    %v395 = vsel %vm115, %v394, %v393
    %v397 = vadd.f32 %v367, %v395
    %399 = vset.pattern.permute.xlu0 0
    %400 = vperm.xlu0 %399, %v142
    %v401 = vpop.permute.xlu0 %400
    %404 = vset.pattern.permute.xlu0 0
    %405 = vperm.xlu0 %404, %v143
    %v406 = vpop.permute.xlu0 %405
    %409 = vset.pattern.permute.xlu0 0
    %410 = vperm.xlu0 %409, %v144
    %v411 = vpop.permute.xlu0 %410
    %v414 = vrot.slane %v41, 1
    %v415 = vrot.slane %v41, 2
    %v419 = vmul.f32 %v401, %v41
    %v420 = vmul.f32 %v406, %v414
    %v421 = vmul.f32 %v411, %v415
    %v425 = vrot.slane %v420, 7
    %v426 = vsel %vm113, %v425, %v419
    %v427 = vrot.slane %v421, 6
    %v428 = vsel %vm115, %v427, %v426
    %v430 = vadd.f32 %v397, %v428
    %431 = vset.pattern.permute.xlu0 63
    %432 = vperm.xlu0 %431, %v142
    %v433 = vpop.permute.xlu0 %432
    %435 = vset.pattern.permute.xlu0 63
    %436 = vperm.xlu0 %435, %v143
    %v437 = vpop.permute.xlu0 %436
    %439 = vset.pattern.permute.xlu0 63
    %440 = vperm.xlu0 %439, %v144
    %v441 = vpop.permute.xlu0 %440
    %v444 = vrot.slane %v42, 1
    %v445 = vrot.slane %v42, 2
    %v449 = vmul.f32 %v433, %v42
    %v450 = vmul.f32 %v437, %v444
    %v451 = vmul.f32 %v441, %v445
    %v455 = vrot.slane %v450, 7
    %v456 = vsel %vm113, %v455, %v449
    %v457 = vrot.slane %v451, 6
    %v458 = vsel %vm115, %v457, %v456
    %v460 = vadd.f32 %v430, %v458
    %462 = vset.pattern.permute.xlu0 0
    %463 = vperm.xlu0 %462, %v145
    %v464 = vpop.permute.xlu0 %463
    %467 = vset.pattern.permute.xlu0 0
    %468 = vperm.xlu0 %467, %v146
    %v469 = vpop.permute.xlu0 %468
    %472 = vset.pattern.permute.xlu0 0
    %473 = vperm.xlu0 %472, %v147
    %v474 = vpop.permute.xlu0 %473
    %v477 = vrot.slane %v43, 1
    %v478 = vrot.slane %v43, 2
    %v479 = vrot.slane %v43, 3
    %v483 = vmul.f32 %v464, %v477
    %v484 = vmul.f32 %v469, %v478
    %v485 = vmul.f32 %v474, %v479
    %v489 = vrot.slane %v483, 7
    %v490 = vrot.slane %v484, 6
    %v491 = vsel %vm113, %v490, %v489
    %v492 = vrot.slane %v485, 5
    %v493 = vsel %vm115, %v492, %v491
    %v495 = vadd.f32 %v460, %v493
    %496 = vset.pattern.permute.xlu0 63
    %497 = vperm.xlu0 %496, %v145
    %v498 = vpop.permute.xlu0 %497
    %500 = vset.pattern.permute.xlu0 63
    %501 = vperm.xlu0 %500, %v146
    %v502 = vpop.permute.xlu0 %501
    %504 = vset.pattern.permute.xlu0 63
    %505 = vperm.xlu0 %504, %v147
    %v506 = vpop.permute.xlu0 %505
    %v509 = vrot.slane %v44, 1
    %v510 = vrot.slane %v44, 2
    %v511 = vrot.slane %v44, 3
    %v515 = vmul.f32 %v498, %v509
    %v516 = vmul.f32 %v502, %v510
    %v517 = vmul.f32 %v506, %v511
    %v521 = vrot.slane %v515, 7
    %v522 = vrot.slane %v516, 6
    %v523 = vsel %vm113, %v522, %v521
    %v524 = vrot.slane %v517, 5
    %v525 = vsel %vm115, %v524, %v523
    %v527 = vadd.f32 %v495, %v525
    %vm528 = vcmask 124928
    %v529 = vsel %vm528, %v527, 0.0
    %v530 = vrot.slane %v529, 4
    %v531 = vadd.f32 %v529, %v530
    %v532 = vrot.slane %v531, 2
    %v533 = vadd.f32 %v531, %v532
    %v534 = vrot.slane %v533, 1
    %v535 = vadd.f32 %v533, %v534
    %536 = vxpose.xlu0.b32.start [1/16] %v535, 128
    %537 = vxpose.xlu0.b32.cont [2/16] 0.0, 128
    %538 = vxpose.xlu0.b32.cont [3/16] 0.0, 128
    %539 = vxpose.xlu0.b32.cont [4/16] 0.0, 128
    %540 = vxpose.xlu0.b32.cont [5/16] 0.0, 128
    %541 = vxpose.xlu0.b32.cont [6/16] 0.0, 128
    %542 = vxpose.xlu0.b32.cont [7/16] 0.0, 128
    %543 = vxpose.xlu0.b32.cont [8/16] 0.0, 128
    %544 = vxpose.xlu0.b32.cont [9/16] 0.0, 128
    %545 = vxpose.xlu0.b32.cont [10/16] 0.0, 128
    %546 = vxpose.xlu0.b32.cont [11/16] 0.0, 128
    %547 = vxpose.xlu0.b32.cont [12/16] 0.0, 128
    %548 = vxpose.xlu0.b32.cont [13/16] 0.0, 128
    %549 = vxpose.xlu0.b32.cont [14/16] 0.0, 128
    %550 = vxpose.xlu0.b32.cont [15/16] 0.0, 128
    %551 = vxpose.xlu0.b32.end [16/16] 0.0, 128
    %v552 = vpop.trf.xlu0
    %v553 = vpop.trf.xlu0
    %v554 = vpop.trf.xlu0
    %v555 = vpop.trf.xlu0
    %v556 = vpop.trf.xlu0
    %v557 = vpop.trf.xlu0
    %v558 = vpop.trf.xlu0
    %v559 = vpop.trf.xlu0
    %v560 = vpop.trf.xlu0
    %v561 = vpop.trf.xlu0
    %v562 = vpop.trf.xlu0
    %v563 = vpop.trf.xlu0
    %v564 = vpop.trf.xlu0
    %v565 = vpop.trf.xlu0
    %v566 = vpop.trf.xlu0
    %v567 = vpop.trf.xlu0
    %569 = vset.pattern.permute.xlu0 0
    %570 = vperm.xlu0 %569, %v552
    %v571 = vpop.permute.xlu0 %570
    %v573 = vmul.f32 %v571, %v535
    %575 = vrot.lane.b32.xlu0 %v573, 120
    %v576 = vpop.permute.xlu0 %575
    %vm578 = vcmask 64512
    %579 = vst.msk [vmem:[#allocation2] sm:$0xff] %vm578, %v576
    // Predicated region
    $region10: #{model_forward.1} parent=1 // pred_check
      _
    $region11: #{model_forward.1} parent=1 // pred_check_branch
      %581 = sbr.rel (0) target = $region13
    $region12: #{model_forward.1} parent=1 // pred_region
      %583 = vsyncadd [#allocation3], 0
      %s585 = sshll.u32 [#allocation2], 4
      %s586 = int_to_ptr.vmem [resolvable:$true] %s585
      %s587 = sshll.u32 %s2, 4
      %s588 = int_to_ptr.hbm [resolvable:$true] %s587
      %590 = dma.vmem_to_hbm [thread:$0]  %s586, 128, %s588, [#allocation3]
    $region13: #{model_forward.1} parent=1 // pred_fallthru
      _
    // Predicated region
    $region14: #{model_forward.1} parent=1 // pred_check
      _
    $region15: #{model_forward.1} parent=1 // pred_check_branch
      %592 = sbr.rel (0) target = $region17
    $region16: #{model_forward.1} parent=1 // pred_region
      %594 = dma.done [#allocation3], 128
    $region17: #{model_forward.1} parent=1 // pred_fallthru
      _
    %595 = vsyncpa [#allocation3], 1

</llo_original>
